<compile_context>
chip_gen: v5e
topology: v5e:2x2
jax: 0.10.0
libtpu: 0.0.40
codegen_flags: <defaults>
</compile_context>

<pallas_src>
import functools

import jax
import jax.numpy as jnp
from jax.experimental import pallas as pl
from jax.experimental.pallas import tpu as pltpu


def _round_up(x, m):
    return (x + m - 1) // m * m


def grammar_disc_kernel(x_ref, w1_ref, b1_ref, w2_ref, b2_ref, o_ref, acc_ref,
                        *, inv_seq_len):
    # x_ref : (TB, TS, D) streamed input tile
    # w1_ref: (D, H)  resident;  b1_ref: (1, H) resident
    # w2_ref: (1, H)  resident (2nd Linear weight stored as a row)
    # b2_ref: (1,)    SMEM scalar
    # o_ref : (TB, 1) output tile;  acc_ref: (TB, D) f32 scratch
    s = pl.program_id(1)

    @pl.when(s == 0)
    def _():
        acc_ref[...] = jnp.zeros_like(acc_ref)

    # Sequence-axis partial sum with f32 accumulation (no full-tile f32
    # materialization of x; the reduce runs on the VPU/XLU while the next
    # tile's DMA is in flight).
    acc_ref[...] += jnp.sum(x_ref[...], axis=1, dtype=jnp.float32)

    @pl.when(s == pl.num_programs(1) - 1)
    def _():
        # mean = sum * (1/S), applied once to the small (TB, D) accumulator.
        xm = acc_ref[...] * inv_seq_len
        # First Linear on the MXU with f32 accumulation.
        h = jnp.dot(xm.astype(w1_ref.dtype), w1_ref[...],
                    preferred_element_type=jnp.float32)
        h = jnp.maximum(h + b1_ref[...].astype(jnp.float32), 0.0)
        # Second Linear (N=1): VPU multiply + lane reduce, MXU stays free.
        logit = jnp.sum(h * w2_ref[...].astype(jnp.float32),
                        axis=-1, keepdims=True) + b2_ref[0]
        o_ref[...] = jax.nn.sigmoid(logit).astype(o_ref.dtype)


def _choose_tiles(B, S, D, itemsize, x_tile_budget_bytes=8 * 1024 * 1024):
    """TB: multiple of 8 (f32 sublane), capped at 256 (MXU M dim on the last
    step).  TS: multiple of 8, sized so one streamed x tile stays <= ~8 MiB so
    the double-buffered pipeline fits comfortably in scoped VMEM."""
    TB = min(_round_up(B, 8), 256)
    ts_cap = max(8, (x_tile_budget_bytes // (TB * D * itemsize)) // 8 * 8)
    TS = min(_round_up(S, 8), ts_cap)
    return TB, TS


def grammar_discriminator(x, w1, b1, w2, b2):
    """x: (B, S, D); w1: (D, H); b1: (1, H); w2: (H, 1); b2: (1, 1) -> (B, 1)."""
    B, S, D = x.shape
    H = w1.shape[1]

    TB, TS = _choose_tiles(B, S, D, x.dtype.itemsize)
    B_pad = _round_up(B, TB)
    S_pad = _round_up(S, TS)
    if (B_pad, S_pad) != (B, S):
        # Zero padding leaves the sequence sum unchanged (mean uses the true
        # 1/S); padded batch rows are sliced off below.
        x = jnp.pad(x, ((0, B_pad - B), (0, S_pad - S), (0, 0)))
    nb, ns = B_pad // TB, S_pad // TS

    w2_row = w2.reshape(1, H)   # (H, 1) -> (1, H) row for the VPU reduce
    b2_smem = b2.reshape(1)     # scalar, lives in SMEM

    kernel = functools.partial(grammar_disc_kernel, inv_seq_len=1.0 / S)

    out = pl.pallas_call(
        kernel,
        out_shape=jax.ShapeDtypeStruct((B_pad, 1), jnp.float32),
        grid_spec=pltpu.PrefetchScalarGridSpec(
            num_scalar_prefetch=0,
            grid=(nb, ns),                                   # reduction axis last
            in_specs=[
                # Streamed, double-buffered x tile.
                pl.BlockSpec((TB, TS, D), lambda i, s: (i, s, 0)),
                # Weights/biases: constant index maps -> resident across grid.
                pl.BlockSpec((D, H), lambda i, s: (0, 0)),
                pl.BlockSpec((1, H), lambda i, s: (0, 0)),
                pl.BlockSpec((1, H), lambda i, s: (0, 0)),
                pl.BlockSpec(memory_space=pltpu.MemorySpace.SMEM),
            ],
            out_specs=pl.BlockSpec((TB, 1), lambda i, s: (i, 0)),
            scratch_shapes=[pltpu.VMEM((TB, D), jnp.float32)],
        ),
        compiler_params=pltpu.CompilerParams(
            # Batch axis parallel (2 TCs on v7x); S reduction is "arbitrary".
            dimension_semantics=("parallel", "arbitrary"),
            # Explicit scoped-VMEM budget; safe on v5e/v6e/v7x.
            vmem_limit_bytes=32 * 1024 * 1024,
        ),
    )(x, w1, b1, w2_row, b2_smem)

    return out[:B]


def init_params(key, d_model):
    """Deterministic synthetic init matching nn.Linear shapes (stored as (in, out))."""
    h = d_model // 2
    k1, k2, k3, k4 = jax.random.split(key, 4)
    bound1 = 1.0 / (d_model ** 0.5)
    bound2 = 1.0 / (h ** 0.5)
    w1 = jax.random.uniform(k1, (d_model, h), jnp.float32, -bound1, bound1)
    b1 = jax.random.uniform(k2, (1, h), jnp.float32, -bound1, bound1)
    w2 = jax.random.uniform(k3, (h, 1), jnp.float32, -bound2, bound2)
    b2 = jax.random.uniform(k4, (1, 1), jnp.float32, -bound2, bound2)
    return w1, b1, w2, b2


if __name__ == "__main__":
    d_model = 256
    B, S = 2, 8

    key = jax.random.PRNGKey(0)
    kx, kp = jax.random.split(key)
    x = jax.random.normal(kx, (B, S, d_model), dtype=jnp.float32)
    w1, b1, w2, b2 = init_params(kp, d_model)

    out = grammar_discriminator(x, w1, b1, w2, b2)
    out = jax.block_until_ready(out)

    # Pure-JAX reference.
    xm = x.mean(axis=1)
    ref = jax.nn.sigmoid(jnp.maximum(xm @ w1 + b1, 0.0) @ w2 + b2)
    assert out.shape == (B, 1)
    assert jnp.allclose(out, ref, atol=1e-5, rtol=1e-5)

    print("KERNEL_OK")
</pallas_src>

<mosaic_0001>
module attributes {stable_mosaic.version = 11 : i64} {
  func.func @grammar_disc_kernel(%arg0: i32, %arg1: i32, %arg2: memref<8x8x256xf32, #tpu.memory_space<vmem>>, %arg3: memref<256x128xf32, #tpu.memory_space<vmem>>, %arg4: memref<1x128xf32, #tpu.memory_space<vmem>>, %arg5: memref<1x128xf32, #tpu.memory_space<vmem>>, %arg6: memref<1xf32, #tpu.memory_space<smem>>, %arg7: memref<8x1xf32, #tpu.memory_space<vmem>>, %arg8: memref<8x256xf32, #tpu.memory_space<vmem>>) attributes {dimension_semantics = [#tpu.dimension_semantics<parallel>, #tpu.dimension_semantics<arbitrary>], iteration_bounds = array<i64: 1, 1>, scalar_prefetch = 0 : i64, scratch_operands = 1 : i64, tpu.core_type = #tpu.core_type<tc>, window_params = [{transform_indices = @transform_0, window_bounds = array<i64: 8, 8, 256>}, {pipeline_mode = #tpu.pipeline_mode<synchronous>, transform_indices = @transform_1, window_bounds = array<i64: 256, 128>}, {pipeline_mode = #tpu.pipeline_mode<synchronous>, transform_indices = @transform_2, window_bounds = array<i64: 1, 128>}, {pipeline_mode = #tpu.pipeline_mode<synchronous>, transform_indices = @transform_3, window_bounds = array<i64: 1, 128>}, {transform_indices = @transform_4, window_bounds = array<i64: 1>}, {transform_indices = @transform_5, window_bounds = array<i64: 8, 1>}]} {
    %c0_i32 = arith.constant 0 : i32
    %0 = arith.cmpi eq, %arg1, %c0_i32 : i32
    %1 = arith.extui %0 : i1 to i32
    %c0_i32_0 = arith.constant 0 : i32
    %2 = arith.cmpi ne, %1, %c0_i32_0 : i32
    scf.if %2 {
      %cst_9 = arith.constant 0.000000e+00 : f32
      %11 = vector.broadcast %cst_9 : f32 to vector<8x256xf32>
      %c0_10 = arith.constant 0 : index
      %c0_11 = arith.constant 0 : index
      %12 = vector.load %arg8[%c0_10, %c0_11] : memref<8x256xf32, #tpu.memory_space<vmem>>, vector<8x256xf32>
      tpu.vector_store %arg8[%c0_10, %c0_11], %11 {strides = array<i32>} : memref<8x256xf32, #tpu.memory_space<vmem>>, vector<8x256xf32>,
    } else {
    }
    %c0 = arith.constant 0 : index
    %c0_1 = arith.constant 0 : index
    %3 = vector.load %arg8[%c0, %c0_1] : memref<8x256xf32, #tpu.memory_space<vmem>>, vector<8x256xf32>
    %c0_2 = arith.constant 0 : index
    %c0_3 = arith.constant 0 : index
    %c0_4 = arith.constant 0 : index
    %4 = vector.load %arg2[%c0_2, %c0_3, %c0_4] : memref<8x8x256xf32, #tpu.memory_space<vmem>>, vector<8x8x256xf32>
    %cst = arith.constant dense<0.000000e+00> : vector<8x256xf32>
    %5 = vector.multi_reduction <add>, %4, %cst [1] : vector<8x8x256xf32> to vector<8x256xf32>
    %6 = arith.addf %3, %5 : vector<8x256xf32>
    %c0_5 = arith.constant 0 : index
    %c0_6 = arith.constant 0 : index
    %7 = vector.load %arg8[%c0_5, %c0_6] : memref<8x256xf32, #tpu.memory_space<vmem>>, vector<8x256xf32>
    tpu.vector_store %arg8[%c0_5, %c0_6], %6 {strides = array<i32>} : memref<8x256xf32, #tpu.memory_space<vmem>>, vector<8x256xf32>,
    %c0_i32_7 = arith.constant 0 : i32
    %8 = arith.cmpi eq, %arg1, %c0_i32_7 : i32
    %9 = arith.extui %8 : i1 to i32
    %c0_i32_8 = arith.constant 0 : i32
    %10 = arith.cmpi ne, %9, %c0_i32_8 : i32
    scf.if %10 {
      %c0_9 = arith.constant 0 : index
      %c0_10 = arith.constant 0 : index
      %11 = vector.load %arg8[%c0_9, %c0_10] : memref<8x256xf32, #tpu.memory_space<vmem>>, vector<8x256xf32>
      %cst_11 = arith.constant 1.250000e-01 : f32
      %12 = vector.broadcast %cst_11 : f32 to vector<8x256xf32>
      %13 = arith.mulf %11, %12 : vector<8x256xf32>
      %c0_12 = arith.constant 0 : index
      %c0_13 = arith.constant 0 : index
      %14 = vector.load %arg3[%c0_12, %c0_13] : memref<256x128xf32, #tpu.memory_space<vmem>>, vector<256x128xf32>
      %cst_14 = arith.constant dense<0.000000e+00> : vector<8x128xf32>
      %15 = tpu.matmul %13, %14, %cst_14 {dimension_numbers = #tpu.dot_dimension_numbers<[1], [0], [0], [1], [0, 0, 1, 1], [], []>} : vector<8x256xf32>, vector<256x128xf32>, vector<8x128xf32> -> vector<8x128xf32>
      %c0_15 = arith.constant 0 : index
      %c0_16 = arith.constant 0 : index
      %16 = vector.load %arg4[%c0_15, %c0_16] : memref<1x128xf32, #tpu.memory_space<vmem>>, vector<1x128xf32>
      %17 = vector.broadcast %16 : vector<1x128xf32> to vector<8x128xf32>
      %18 = arith.addf %15, %17 : vector<8x128xf32>
      %cst_17 = arith.constant 0.000000e+00 : f32
      %19 = vector.broadcast %cst_17 : f32 to vector<8x128xf32>
      %20 = arith.maximumf %18, %19 : vector<8x128xf32>
      %c0_18 = arith.constant 0 : index
      %c0_19 = arith.constant 0 : index
      %21 = vector.load %arg5[%c0_18, %c0_19] : memref<1x128xf32, #tpu.memory_space<vmem>>, vector<1x128xf32>
      %22 = vector.broadcast %21 : vector<1x128xf32> to vector<8x128xf32>
      %23 = arith.mulf %20, %22 : vector<8x128xf32>
      %cst_20 = arith.constant dense<0.000000e+00> : vector<8xf32>
      %24 = vector.multi_reduction <add>, %23, %cst_20 [1] : vector<8x128xf32> to vector<8xf32>
      %25 = vector.shape_cast %24 : vector<8xf32> to vector<8x1xf32>
      %c0_21 = arith.constant 0 : index
      %26 = memref.load %arg6[%c0_21] : memref<1xf32, #tpu.memory_space<smem>>
      %27 = vector.broadcast %26 : f32 to vector<8x1xf32>
      %28 = arith.addf %25, %27 : vector<8x1xf32>
      %29 = arith.negf %28 : vector<8x1xf32>
      %30 = math.exp %29 : vector<8x1xf32>
      %cst_22 = arith.constant 1.000000e+00 : f32
      %31 = vector.broadcast %cst_22 : f32 to vector<8x1xf32>
      %32 = arith.addf %31, %30 : vector<8x1xf32>
      %33 = arith.divf %31, %32 : vector<8x1xf32>
      %c0_23 = arith.constant 0 : index
      %c0_24 = arith.constant 0 : index
      %34 = vector.load %arg7[%c0_23, %c0_24] : memref<8x1xf32, #tpu.memory_space<vmem>>, vector<8x1xf32>
      tpu.vector_store %arg7[%c0_23, %c0_24], %33 {strides = array<i32>} : memref<8x1xf32, #tpu.memory_space<vmem>>, vector<8x1xf32>,
    } else {
    }
    return
  }
  func.func @transform_0(%arg0: i32, %arg1: i32) -> (i32, i32, i32) {
    %c0_i32 = arith.constant 0 : i32
    %c0_i32_0 = arith.constant 0 : i32
    return %arg0, %arg1, %c0_i32 : i32, i32, i32
  }
  func.func @transform_1(%arg0: i32, %arg1: i32) -> (i32, i32) {
    %c0_i32 = arith.constant 0 : i32
    %c0_i32_0 = arith.constant 0 : i32
    %c0_i32_1 = arith.constant 0 : i32
    return %c0_i32, %c0_i32_0 : i32, i32
  }
  func.func @transform_2(%arg0: i32, %arg1: i32) -> (i32, i32) {
    %c0_i32 = arith.constant 0 : i32
    %c0_i32_0 = arith.constant 0 : i32
    %c0_i32_1 = arith.constant 0 : i32
    return %c0_i32, %c0_i32_0 : i32, i32
  }
  func.func @transform_3(%arg0: i32, %arg1: i32) -> (i32, i32) {
    %c0_i32 = arith.constant 0 : i32
    %c0_i32_0 = arith.constant 0 : i32
    %c0_i32_1 = arith.constant 0 : i32
    return %c0_i32, %c0_i32_0 : i32, i32
  }
  func.func @transform_4(%arg0: i32, %arg1: i32) -> i32 {
    %c0_i32 = arith.constant 0 : i32
    %c0_i32_0 = arith.constant 0 : i32
    return %c0_i32 : i32
  }
  func.func @transform_5(%arg0: i32, %arg1: i32) -> (i32, i32) {
    %c0_i32 = arith.constant 0 : i32
    %c0_i32_0 = arith.constant 0 : i32
    return %arg0, %c0_i32 : i32, i32
  }
}

</mosaic_0001>

<llo_original>
// kernel: tpu_custom_call.1
$region0: #{tpu_custom_call.1}
  #allocation0 [shape = 'u32[]', space=smem, size = 0x4, offset = 0x4, fixed_abs, tag = 'smem constant byte address 0x4 - core index']
  #allocation1 [shape = 'u32[72,128]{1,0:T(1,128)}', space=vmem, size = 0x9000, scoped, tag = 'internal scratch']
  #allocation2 [shape = 'f32[8,256]{1,0:T(8,128)}', space=vmem, size = 0x2000, scoped, tag = 'scratch operand']
  #allocation3 [shape = 'f32[1]{0:T(128)S(6)}', space=smem, size = 0x200, scoped, tag = 'scoped memory for tpu_custom_call.1']
  %s0 = inlined_call_operand.hbm [shape: f32[8,8,256], index: 0, kind: input, shape index: {}]
  %s1 = inlined_call_operand.hbm [shape: f32[256,128], index: 1, kind: input, shape index: {}]
  %s2 = inlined_call_operand.vmem [shape: f32[1,128], index: 2, kind: input, shape index: {}]
  %s3 = inlined_call_operand.vmem [shape: f32[1,128], index: 3, kind: input, shape index: {}]
  %s4 = inlined_call_operand.<no memory space> [shape: f32[1], index: 4, kind: input, shape index: {}]
  %s5 = inlined_call_operand.vmem [shape: f32[8,1], index: 5, kind: output, shape index: {}]
  %s6 = sld [smem:[#allocation0]]
  $region46: #{tpu_custom_call.1} parent=0
    _
  %s8 = ssub.s32 1, %s6
  %s9 = scalar_select 0, %s8, %s6
  %10 = sst [smem:[#allocation3]] %s4
  $region1: #{tpu_custom_call.1} parent=0
    #allocation4 [shape = 'u8[65536]{0}', space=vmem, size = 0x10000, scoped, tag = 'input window, operand 0, single buffered']
    #allocation5 [shape = 's32[1]{0}', space=sflag, size = 0x4, scoped, tag = 'scoped memory for tpu_custom_call.1']
    #allocation6 [shape = 'u8[131072]{0}', space=vmem, size = 0x20000, scoped, tag = 'input window, operand 1, single buffered']
    #allocation7 [shape = 's32[1]{0}', space=sflag, size = 0x4, scoped, tag = 'scoped memory for tpu_custom_call.1']
    %11 = vsyncpa [#allocation5], 0
    %12 = vsyncpa [#allocation7], 0
    // Predicated region
    $region2: #{tpu_custom_call.1} parent=1 // pred_check
      _
    $region3: #{tpu_custom_call.1} parent=1 // pred_check_branch
      %14 = sbr.rel (0) target = $region5
    $region4: #{tpu_custom_call.1} parent=1 // pred_region
      %16 = vsyncadd [#allocation5], 0
      %s17 = sshll.u32 %s0, 4
      %s18 = int_to_ptr.hbm [resolvable:$true] %s17
      %s19 = sshll.u32 [#allocation4], 4
      %s20 = int_to_ptr.vmem [resolvable:$true] %s19
      %25 = dma.hbm_to_vmem [thread:$0]  %s18, 2048, %s20, [#allocation5], 256, 256, 16
    $region5: #{tpu_custom_call.1} parent=1 // pred_fallthru
      _
    // Predicated region
    $region6: #{tpu_custom_call.1} parent=1 // pred_check
      _
    $region7: #{tpu_custom_call.1} parent=1 // pred_check_branch
      %27 = sbr.rel (0) target = $region9
    $region8: #{tpu_custom_call.1} parent=1 // pred_region
      %29 = vsyncadd [#allocation7], 0
      %s30 = sshll.u32 %s1, 4
      %s31 = int_to_ptr.hbm [resolvable:$true] %s30
      %s32 = sshll.u32 [#allocation6], 4
      %s33 = int_to_ptr.vmem [resolvable:$true] %s32
      %38 = dma.hbm_to_vmem [thread:$0]  %s31, 4096, %s33, [#allocation7], 128, 128, 8
    $region9: #{tpu_custom_call.1} parent=1 // pred_fallthru
      _
    // Predicated region
    $region10: #{tpu_custom_call.1} parent=1 // pred_check
      _
    $region11: #{tpu_custom_call.1} parent=1 // pred_check_branch
      %40 = sbr.rel (0) target = $region13
    $region12: #{tpu_custom_call.1} parent=1 // pred_region
      _
    $region13: #{tpu_custom_call.1} parent=1 // pred_fallthru
      _
    // Predicated region
    $region14: #{tpu_custom_call.1} parent=1 // pred_check
      _
    $region15: #{tpu_custom_call.1} parent=1 // pred_check_branch
      %42 = sbr.rel (0) target = $region17
    $region16: #{tpu_custom_call.1} parent=1 // pred_region
      _
    $region17: #{tpu_custom_call.1} parent=1 // pred_fallthru
      _
    // Predicated region
    $region18: #{tpu_custom_call.1} parent=1 // pred_check
      _
    $region19: #{tpu_custom_call.1} parent=1 // pred_check_branch
      %44 = sbr.rel (0) target = $region21
    $region20: #{tpu_custom_call.1} parent=1 // pred_region
      _
    $region21: #{tpu_custom_call.1} parent=1 // pred_fallthru
      _
    // Predicated region
    $region22: #{tpu_custom_call.1} parent=1 // pred_check
      _
    $region23: #{tpu_custom_call.1} parent=1 // pred_check_branch
      %46 = sbr.rel (0) target = $region25
    $region24: #{tpu_custom_call.1} parent=1 // pred_region
      %48 = dma.done [#allocation5], 2048
    $region25: #{tpu_custom_call.1} parent=1 // pred_fallthru
      _
    // Predicated region
    $region26: #{tpu_custom_call.1} parent=1 // pred_check
      _
    $region27: #{tpu_custom_call.1} parent=1 // pred_check_branch
      %50 = sbr.rel (0) target = $region29
    $region28: #{tpu_custom_call.1} parent=1 // pred_region
      %52 = dma.done [#allocation7], 4096
    $region29: #{tpu_custom_call.1} parent=1 // pred_fallthru
      _
    %p53 = scmp.eq.s32.totalorder 0, 0
    // Predicated region
    $region30: #{tpu_custom_call.1} parent=1 // pred_check
      %p54 = pneg %p53
    $region31: #{tpu_custom_call.1} parent=1 // pred_check_branch
      %56 = sbr.rel (%p54) target = $region33
    $region32: #{tpu_custom_call.1} parent=1 // pred_region
      %57 = vst [vmem:[#allocation2] sm:$0xff] 0.0
      %58 = vst [vmem:[#allocation2 + $0x8] sm:$0xff] 0.0
    $region33: #{tpu_custom_call.1} parent=1 // pred_fallthru
      _
    %v59 = vld [vmem:[#allocation2] sm:$0xff]
    %v60 = vld [vmem:[#allocation2 + $0x8] sm:$0xff]
    %v61 = vld [vmem:[#allocation4] sm:$0xff]
    %v62 = vld [vmem:[#allocation4 + $0x8] sm:$0xff]
    %v63 = vld [vmem:[#allocation4 + $0x10] sm:$0xff]
    %v64 = vld [vmem:[#allocation4 + $0x18] sm:$0xff]
    %v65 = vld [vmem:[#allocation4 + $0x20] sm:$0xff]
    %v66 = vld [vmem:[#allocation4 + $0x28] sm:$0xff]
    %v67 = vld [vmem:[#allocation4 + $0x30] sm:$0xff]
    %v68 = vld [vmem:[#allocation4 + $0x38] sm:$0xff]
    %v69 = vld [vmem:[#allocation4 + $0x40] sm:$0xff]
    %v70 = vld [vmem:[#allocation4 + $0x48] sm:$0xff]
    %v71 = vld [vmem:[#allocation4 + $0x50] sm:$0xff]
    %v72 = vld [vmem:[#allocation4 + $0x58] sm:$0xff]
    %v73 = vld [vmem:[#allocation4 + $0x60] sm:$0xff]
    %v74 = vld [vmem:[#allocation4 + $0x68] sm:$0xff]
    %v75 = vld [vmem:[#allocation4 + $0x70] sm:$0xff]
    %v76 = vld [vmem:[#allocation4 + $0x78] sm:$0xff]
    %v77 = vrot.slane %v61, 4
    %v78 = vadd.f32 %v61, %v77
    %v79 = vrot.slane %v78, 2
    %v80 = vadd.f32 %v78, %v79
    %v81 = vrot.slane %v80, 1
    %v82 = vadd.f32 %v80, %v81
    %v83 = vrot.slane %v62, 4
    %v84 = vadd.f32 %v62, %v83
    %v85 = vrot.slane %v84, 2
    %v86 = vadd.f32 %v84, %v85
    %v87 = vrot.slane %v86, 1
    %v88 = vadd.f32 %v86, %v87
    %v89 = vrot.slane %v63, 4
    %v90 = vadd.f32 %v63, %v89
    %v91 = vrot.slane %v90, 2
    %v92 = vadd.f32 %v90, %v91
    %v93 = vrot.slane %v92, 1
    %v94 = vadd.f32 %v92, %v93
    %v95 = vrot.slane %v64, 4
    %v96 = vadd.f32 %v64, %v95
    %v97 = vrot.slane %v96, 2
    %v98 = vadd.f32 %v96, %v97
    %v99 = vrot.slane %v98, 1
    %v100 = vadd.f32 %v98, %v99
    %v101 = vrot.slane %v65, 4
    %v102 = vadd.f32 %v65, %v101
    %v103 = vrot.slane %v102, 2
    %v104 = vadd.f32 %v102, %v103
    %v105 = vrot.slane %v104, 1
    %v106 = vadd.f32 %v104, %v105
    %v107 = vrot.slane %v66, 4
    %v108 = vadd.f32 %v66, %v107
    %v109 = vrot.slane %v108, 2
    %v110 = vadd.f32 %v108, %v109
    %v111 = vrot.slane %v110, 1
    %v112 = vadd.f32 %v110, %v111
    %v113 = vrot.slane %v67, 4
    %v114 = vadd.f32 %v67, %v113
    %v115 = vrot.slane %v114, 2
    %v116 = vadd.f32 %v114, %v115
    %v117 = vrot.slane %v116, 1
    %v118 = vadd.f32 %v116, %v117
    %v119 = vrot.slane %v68, 4
    %v120 = vadd.f32 %v68, %v119
    %v121 = vrot.slane %v120, 2
    %v122 = vadd.f32 %v120, %v121
    %v123 = vrot.slane %v122, 1
    %v124 = vadd.f32 %v122, %v123
    %v125 = vrot.slane %v69, 4
    %v126 = vadd.f32 %v69, %v125
    %v127 = vrot.slane %v126, 2
    %v128 = vadd.f32 %v126, %v127
    %v129 = vrot.slane %v128, 1
    %v130 = vadd.f32 %v128, %v129
    %v131 = vrot.slane %v70, 4
    %v132 = vadd.f32 %v70, %v131
    %v133 = vrot.slane %v132, 2
    %v134 = vadd.f32 %v132, %v133
    %v135 = vrot.slane %v134, 1
    %v136 = vadd.f32 %v134, %v135
    %v137 = vrot.slane %v71, 4
    %v138 = vadd.f32 %v71, %v137
    %v139 = vrot.slane %v138, 2
    %v140 = vadd.f32 %v138, %v139
    %v141 = vrot.slane %v140, 1
    %v142 = vadd.f32 %v140, %v141
    %v143 = vrot.slane %v72, 4
    %v144 = vadd.f32 %v72, %v143
    %v145 = vrot.slane %v144, 2
    %v146 = vadd.f32 %v144, %v145
    %v147 = vrot.slane %v146, 1
    %v148 = vadd.f32 %v146, %v147
    %v149 = vrot.slane %v73, 4
    %v150 = vadd.f32 %v73, %v149
    %v151 = vrot.slane %v150, 2
    %v152 = vadd.f32 %v150, %v151
    %v153 = vrot.slane %v152, 1
    %v154 = vadd.f32 %v152, %v153
    %v155 = vrot.slane %v74, 4
    %v156 = vadd.f32 %v74, %v155
    %v157 = vrot.slane %v156, 2
    %v158 = vadd.f32 %v156, %v157
    %v159 = vrot.slane %v158, 1
    %v160 = vadd.f32 %v158, %v159
    %v161 = vrot.slane %v75, 4
    %v162 = vadd.f32 %v75, %v161
    %v163 = vrot.slane %v162, 2
    %v164 = vadd.f32 %v162, %v163
    %v165 = vrot.slane %v164, 1
    %v166 = vadd.f32 %v164, %v165
    %v167 = vrot.slane %v76, 4
    %v168 = vadd.f32 %v76, %v167
    %v169 = vrot.slane %v168, 2
    %v170 = vadd.f32 %v168, %v169
    %v171 = vrot.slane %v170, 1
    %v172 = vadd.f32 %v170, %v171
    %vm189 = vcmask 1041409
    %v190 = vsel %vm189, %v94, %v82
    %vm191 = vcmask 1042434
    %v192 = vsel %vm191, %v106, %v190
    %vm193 = vcmask 1043459
    %v194 = vsel %vm193, %v118, %v192
    %vm195 = vcmask 1044484
    %v196 = vsel %vm195, %v130, %v194
    %vm197 = vcmask 1045509
    %v198 = vsel %vm197, %v142, %v196
    %vm199 = vcmask 1046534
    %v200 = vsel %vm199, %v154, %v198
    %vm201 = vcmask 1047559
    %v202 = vsel %vm201, %v166, %v200
    %v203 = vsel %vm189, %v100, %v88
    %v204 = vsel %vm191, %v112, %v203
    %v205 = vsel %vm193, %v124, %v204
    %v206 = vsel %vm195, %v136, %v205
    %v207 = vsel %vm197, %v148, %v206
    %v208 = vsel %vm199, %v160, %v207
    %v209 = vsel %vm201, %v172, %v208
    %v212 = vadd.f32 %v59, %v202
    %v213 = vadd.f32 %v60, %v209
    %214 = vst [vmem:[#allocation2] sm:$0xff] %v212
    %215 = vst [vmem:[#allocation2 + $0x8] sm:$0xff] %v213
    // Predicated region
    $region34: #{tpu_custom_call.1} parent=1 // pred_check
      %p216 = pneg %p53
    $region35: #{tpu_custom_call.1} parent=1 // pred_check_branch
      %218 = sbr.rel (%p216) target = $region37
    $region36: #{tpu_custom_call.1} parent=1 // pred_region
      %v219 = vld [vmem:[#allocation2] sm:$0xff]
      %v220 = vld [vmem:[#allocation2 + $0x8] sm:$0xff]
      %v221 = vmul.f32 %v219, 0.125
      %v222 = vmul.f32 %v220, 0.125
      %v223 = vld [vmem:[#allocation6] sm:$0xff]
      %v224 = vld [vmem:[#allocation6 + $0x8] sm:$0xff]
      %v225 = vld [vmem:[#allocation6 + $0x10] sm:$0xff]
      %v226 = vld [vmem:[#allocation6 + $0x18] sm:$0xff]
      %v227 = vld [vmem:[#allocation6 + $0x20] sm:$0xff]
      %v228 = vld [vmem:[#allocation6 + $0x28] sm:$0xff]
      %v229 = vld [vmem:[#allocation6 + $0x30] sm:$0xff]
      %v230 = vld [vmem:[#allocation6 + $0x38] sm:$0xff]
      %v231 = vld [vmem:[#allocation6 + $0x40] sm:$0xff]
      %v232 = vld [vmem:[#allocation6 + $0x48] sm:$0xff]
      %v233 = vld [vmem:[#allocation6 + $0x50] sm:$0xff]
      %v234 = vld [vmem:[#allocation6 + $0x58] sm:$0xff]
      %v235 = vld [vmem:[#allocation6 + $0x60] sm:$0xff]
      %v236 = vld [vmem:[#allocation6 + $0x68] sm:$0xff]
      %v237 = vld [vmem:[#allocation6 + $0x70] sm:$0xff]
      %v238 = vld [vmem:[#allocation6 + $0x78] sm:$0xff]
      %v239 = vld [vmem:[#allocation6 + $0x80] sm:$0xff]
      %v240 = vld [vmem:[#allocation6 + $0x88] sm:$0xff]
      %v241 = vld [vmem:[#allocation6 + $0x90] sm:$0xff]
      %v242 = vld [vmem:[#allocation6 + $0x98] sm:$0xff]
      %v243 = vld [vmem:[#allocation6 + $0xa0] sm:$0xff]
      %v244 = vld [vmem:[#allocation6 + $0xa8] sm:$0xff]
      %v245 = vld [vmem:[#allocation6 + $0xb0] sm:$0xff]
      %v246 = vld [vmem:[#allocation6 + $0xb8] sm:$0xff]
      %v247 = vld [vmem:[#allocation6 + $0xc0] sm:$0xff]
      %v248 = vld [vmem:[#allocation6 + $0xc8] sm:$0xff]
      %v249 = vld [vmem:[#allocation6 + $0xd0] sm:$0xff]
      %v250 = vld [vmem:[#allocation6 + $0xd8] sm:$0xff]
      %v251 = vld [vmem:[#allocation6 + $0xe0] sm:$0xff]
      %v252 = vld [vmem:[#allocation6 + $0xe8] sm:$0xff]
      %v253 = vld [vmem:[#allocation6 + $0xf0] sm:$0xff]
      %v254 = vld [vmem:[#allocation6 + $0xf8] sm:$0xff]
      %v255 = vld [vmem:[%s2] sm:$0x1]
      %v257 = vperm.slane %v255, 0
      %259 = vmatpush.msra.mxu0 %v238
      %260 = vmatpush.msra.mxu0 %v237
      %261 = vmatpush.msra.mxu0 %v236
      %262 = vmatpush.msra.mxu0 %v235
      %263 = vmatpush.msra.mxu0 %v234
      %264 = vmatpush.msra.mxu0 %v233
      %265 = vmatpush.msra.mxu0 %v232
      %266 = vmatpush.msra.mxu0 %v231
      %267 = vmatpush.msra.mxu0 %v230
      %268 = vmatpush.msra.mxu0 %v229
      %269 = vmatpush.msra.mxu0 %v228
      %270 = vmatpush.msra.mxu0 %v227
      %271 = vmatpush.msra.mxu0 %v226
      %272 = vmatpush.msra.mxu0 %v225
      %273 = vmatpush.msra.mxu0 %v224
      %274 = vmatpush.msra.mxu0 %v223
      %275 = vmatmul.f32.gmra.mxu0 %v221
      %v276 = vpop.f32.mrf.mxu0
      %v277 = vadd.f32 %v257, %v276
      %278 = vdwg.mxu0
      %279 = vmatpush.msra.mxu0 %v254
      %280 = vmatpush.msra.mxu0 %v253
      %281 = vmatpush.msra.mxu0 %v252
      %282 = vmatpush.msra.mxu0 %v251
      %283 = vmatpush.msra.mxu0 %v250
      %284 = vmatpush.msra.mxu0 %v249
      %285 = vmatpush.msra.mxu0 %v248
      %286 = vmatpush.msra.mxu0 %v247
      %287 = vmatpush.msra.mxu0 %v246
      %288 = vmatpush.msra.mxu0 %v245
      %289 = vmatpush.msra.mxu0 %v244
      %290 = vmatpush.msra.mxu0 %v243
      %291 = vmatpush.msra.mxu0 %v242
      %292 = vmatpush.msra.mxu0 %v241
      %293 = vmatpush.msra.mxu0 %v240
      %294 = vmatpush.msra.mxu0 %v239
      %295 = vmatmul.f32.gmra.mxu0 %v222
      %v296 = vpop.f32.mrf.mxu0
      %v297 = vadd.f32 %v277, %v296
      %298 = vdwg.mxu0
      %v299 = vmax.f32 %v297, 0.0
      %v300 = vld [vmem:[%s3] sm:$0x1]
      %v302 = vperm.slane %v300, 0
      %v304 = vmul.f32 %v299, %v302
      %305 = vadd.xlane.f32.xlu0 %v304
      %v306 = vpop.xlane.xlu0 %305
      %s307 = sld [smem:[#allocation3]]
      %v308 = vstv %s307
      %v309 = vadd.f32 %v306, %v308
      %v310 = vxor.u32 %v309, 2147483648
      %v311 = vmul.f32 %v310, 1.442695
      %v312 = vpow.pop %v311
      %v313 = vadd.f32 %v312, 1.0
      %v314 = vrcp.pop %v313
      %v315 = vmul.f32 %v313, %v314
      %v316 = vsub.f32 1.0, %v315
      %v317 = vmul.f32 %v314, %v316
      %v318 = vadd.f32 %v314, %v317
      %vm319 = vweird.f32 %v313
      %vm320 = vweird.f32 %v314
      %vm321 = vmor %vm319, %vm320
      %v322 = vsel %vm321, %v314, %v318
      %v323 = vand.u32 2147483647, %v313
      %vm324 = vcmp.eq.f32.partialorder %v323, 8.507059e+37
      %v325 = vand.u32 %v313, 2147483648
      %v326 = vor.u32 1.1754944e-38, %v325
      %v327 = vsel %vm324, %v326, %v322
      %v328 = vmul.f32 1.0, %v327
      %vm329 = vcmask 7168
      %330 = vst.msk [vmem:[%s5] sm:$0xff] %vm329, %v328
    $region37: #{tpu_custom_call.1} parent=1 // pred_fallthru
      _
    // Predicated region
    $region38: #{tpu_custom_call.1} parent=1 // pred_check
      _
    $region39: #{tpu_custom_call.1} parent=1 // pred_check_branch
      %332 = sbr.rel (0) target = $region41
    $region40: #{tpu_custom_call.1} parent=1 // pred_region
      _
    $region41: #{tpu_custom_call.1} parent=1 // pred_fallthru
      _
    // Predicated region
    $region42: #{tpu_custom_call.1} parent=1 // pred_check
      _
    $region43: #{tpu_custom_call.1} parent=1 // pred_check_branch
      %334 = sbr.rel (0) target = $region45
    $region44: #{tpu_custom_call.1} parent=1 // pred_region
      _
    $region45: #{tpu_custom_call.1} parent=1 // pred_fallthru
      _
    %335 = vsyncpa [#allocation5], 1
    %336 = vsyncpa [#allocation7], 1

</llo_original>
